<compile_context>
chip_gen: v7x
topology: tpu7x:2x2x1
jax: 0.10.0
libtpu: 0.0.40
codegen_flags: <defaults>
</compile_context>

<pallas_src>
import jax
import jax.numpy as jnp
from jax.experimental import pallas as pl
from jax.experimental.pallas import tpu as pltpu


_MIB = 1024 * 1024

# Squeeze sentinel for the unit batch dim of each block (None is the
# long-standing equivalent if pl.Squeezed is unavailable).
_SQ = pl.Squeezed() if hasattr(pl, "Squeezed") else None


def _transpose_tile_kernel(x_ref, o_ref):
    # x_ref: (t_hw, t_c) tile, o_ref: (t_c, t_hw) tile -- 2-D XLU transpose.
    x = x_ref[...]
    if hasattr(pltpu, "einshape"):
        try:
            # Lane-layout-aware swap; keeps the VALU slot free and avoids extra
            # relayout copies when the lane dim is not a 128-multiple.
            o_ref[...] = pltpu.einshape("ab->ba", x)
            return
        except Exception:
            pass  # fall back to a plain transpose
    o_ref[...] = x.T


def _round_up(x: int, m: int) -> int:
    return ((x + m - 1) // m) * m


def _padded_block_bytes(sublane: int, lane: int, itemsize: int) -> int:
    """VMEM bytes of one (sublane, lane) block, including lane/sublane padding."""
    sub_mult = {4: 8, 2: 16, 1: 32}.get(itemsize, 8)
    return _round_up(sublane, sub_mult) * _round_up(lane, 128) * itemsize


def _vmem_capacity_bytes() -> int:
    """Physical per-core VMEM; conservative (v7x) fallback if unqueryable."""
    try:
        return int(pltpu.get_tpu_info().vmem_capacity_bytes)
    except Exception:
        return 64 * _MIB


def _tile_candidates(n: int) -> list:
    """Legal tile sizes along an axis: multiples of 128 dividing n, plus n itself
    (a full-extent block is always legal regardless of the (8,128) rule)."""
    cands = [t for t in range(128, n + 1, 128) if n % t == 0]
    if n not in cands:
        cands.append(n)
    return cands


def _choose_tiles(hw: int, c: int, itemsize: int, batch: int,
                  budget_bytes: int, target_steps: int = 8):
    """Pick (t_hw, t_c) for the per-batch (HW, C) -> (C, HW) transpose.

    Returns (t_hw, t_c, double_buffered_footprint_bytes, grid_steps).
    """
    configs = []
    for t_hw in _tile_candidates(hw):
        for t_c in _tile_candidates(c):
            # Double-buffered, padding-aware footprint of one grid step:
            # input block (t_hw, t_c) + output block (t_c, t_hw).
            fp = 2 * (_padded_block_bytes(t_hw, t_c, itemsize)
                      + _padded_block_bytes(t_c, t_hw, itemsize))
            steps = batch * (hw // t_hw) * (c // t_c)
            configs.append((t_hw, t_c, fp, steps))

    fitting = [cfg for cfg in configs if cfg[2] <= budget_bytes]
    if fitting:
        def key(cfg):
            t_hw, t_c, _fp, steps = cfg
            # 1) enough grid steps for both v7x TCs + pipelining (saturates at
            #    target_steps), 2) biggest tile (fewest steps, largest DMAs),
            # 3) lane-dense output stores (t_hw a 128-multiple) as tie-break.
            return (min(steps, target_steps), t_hw * t_c, t_hw % 128 == 0)
        return max(fitting, key=key)

    # Nothing fits the budget (huge non-128-divisible axis): take the
    # smallest-footprint config and let vmem_limit_bytes cover it.
    return min(configs, key=lambda cfg: cfg[2])


def reshape_b_hw_c_to_b_c_h_w(x: jax.Array, h: int, w: int,
                              *, min_pallas_bytes: int = 2 * _MIB) -> jax.Array:
    """einops.rearrange(x, 'b (h w) c -> b c h w', h=h, w=w)."""
    b, hw, c = x.shape
    assert hw == h * w, f"sequence length {hw} != h*w = {h * w}"
    itemsize = jnp.dtype(x.dtype).itemsize
    total_bytes = b * hw * c * itemsize

    if total_bytes < min_pallas_bytes:
        # Small-size escape hatch: at actual FusionModel sizes (B<=2, HW=196,
        # C=384, <1 MiB) the pallas_call launch cost and the extra HBM round
        # trip dominate; let XLA fuse the transpose into the consumer instead.
        return jnp.transpose(x, (0, 2, 1)).reshape(b, c, h, w)

    cap = _vmem_capacity_bytes()
    # ~24 MiB double-buffered tile budget on v5e/v6e; (cap*3)//8 = 24 MiB on
    # v7x's 64 MiB physical VMEM as well, so the same cap is safe everywhere.
    budget = min(24 * _MIB, (cap * 3) // 8)
    t_hw, t_c, footprint, _steps = _choose_tiles(hw, c, itemsize, b, budget)
    n_hw = hw // t_hw
    n_c = c // t_c

    # Explicit scoped-VMEM limit: generous headroom over the double-buffered
    # footprint (needed on v5e's 16 MiB default), capped well under physical
    # VMEM (64 MiB on v7x, 128 MiB on v5e/v6e).
    vmem_limit = int(min(max(footprint + 8 * _MIB, 32 * _MIB), (cap * 3) // 4))

    out_chw = pl.pallas_call(
        _transpose_tile_kernel,
        out_shape=jax.ShapeDtypeStruct((b, c, hw), x.dtype),
        grid=(b, n_hw, n_c),
        in_specs=[
            # (1, t_hw, t_c) tile of the input, batch dim squeezed.
            pl.BlockSpec((_SQ, t_hw, t_c), lambda i, j, k: (i, j, k)),
        ],
        # (1, t_c, t_hw) tile of the output, batch dim squeezed.
        out_specs=pl.BlockSpec((_SQ, t_c, t_hw), lambda i, j, k: (i, k, j)),
        compiler_params=pltpu.CompilerParams(
            dimension_semantics=("parallel", "parallel", "parallel"),
            vmem_limit_bytes=vmem_limit,
        ),
        cost_estimate=pl.CostEstimate(
            flops=0,
            transcendentals=0,
            bytes_accessed=2 * total_bytes,  # read + write
        ),
    )(x)

    # Free row-major reshape: (B, C, H*W) -> (B, C, H, W).
    return out_chw.reshape(b, c, h, w)


class Reshape:
    """JAX/Pallas analogue of the einops rearrange used in fusion.py for the
    pattern 'b (h w) c -> b c h w'."""

    def __init__(self, pattern: str, **axes_lengths):
        assert pattern == "b (h w) c -> b c h w", (
            "This kernel implements the rearrange pattern used in fusion.py"
        )
        self.pattern = pattern
        self.axes_lengths = axes_lengths

    def __call__(self, x: jax.Array, *, min_pallas_bytes: int = 2 * _MIB) -> jax.Array:
        return reshape_b_hw_c_to_b_c_h_w(
            x, h=self.axes_lengths["h"], w=self.axes_lengths["w"],
            min_pallas_bytes=min_pallas_bytes,
        )


if __name__ == "__main__":
    key = jax.random.PRNGKey(0)

    # Case 1: the actual FusionModel shape (HW = 14*14 = 196, C = 384).
    # Force the Pallas path (min_pallas_bytes=0) to exercise the C-tiled grid.
    B, H, W, C = 2, 14, 14, 384
    x = jax.random.normal(key, (B, H * W, C), dtype=jnp.float32)
    out = jax.block_until_ready(
        reshape_b_hw_c_to_b_c_h_w(x, h=H, w=W, min_pallas_bytes=0)
    )
    ref = jnp.transpose(x, (0, 2, 1)).reshape(B, C, H, W)
    assert out.shape == (B, C, H, W), out.shape
    assert out.dtype == x.dtype
    assert jnp.array_equal(out, ref), "Pallas rearrange mismatch (HW=196, C=384)"

    # Case 2: a 128-divisible HW path with narrow channels (HW tiled instead).
    B2, H2, W2, C2 = 2, 16, 16, 32
    x2 = jax.random.normal(key, (B2, H2 * W2, C2), dtype=jnp.float32)
    out2 = jax.block_until_ready(
        reshape_b_hw_c_to_b_c_h_w(x2, h=H2, w=W2, min_pallas_bytes=0)
    )
    ref2 = jnp.transpose(x2, (0, 2, 1)).reshape(B2, C2, H2, W2)
    assert jnp.array_equal(out2, ref2), "Pallas rearrange mismatch (HW=256, C=32)"

    # Case 3: default module path — small-size escape hatch (plain XLA
    # transpose, what the FusionModel shapes actually use).
    module = Reshape("b (h w) c -> b c h w", h=H, w=W)
    out3 = jax.block_until_ready(module(x))
    assert jnp.array_equal(out3, ref), "Escape-hatch path mismatch"

    print("KERNEL_OK")
</pallas_src>

<mosaic_0001>
module attributes {stable_mosaic.version = 11 : i64} {
  func.func @_transpose_tile_kernel(%arg0: i32, %arg1: i32, %arg2: i32, %arg3: memref<1x196x128xf32, #tpu.memory_space<vmem>>, %arg4: memref<1x128x196xf32, #tpu.memory_space<vmem>>) attributes {dimension_semantics = [#tpu.dimension_semantics<parallel>, #tpu.dimension_semantics<parallel>, #tpu.dimension_semantics<parallel>], iteration_bounds = array<i64: 2, 1, 3>, scalar_prefetch = 0 : i64, scratch_operands = 0 : i64, tpu.core_type = #tpu.core_type<tc>, window_params = [{transform_indices = @transform_0, window_bounds = array<i64: 1, 196, 128>}, {transform_indices = @transform_1, window_bounds = array<i64: 1, 128, 196>}]} {
    %c0 = arith.constant 0 : index
    %c0_0 = arith.constant 0 : index
    %c0_1 = arith.constant 0 : index
    %0 = vector.load %arg3[%c0, %c0_0, %c0_1] : memref<1x196x128xf32, #tpu.memory_space<vmem>>, vector<1x196x128xf32>
    %1 = vector.shape_cast %0 : vector<1x196x128xf32> to vector<196x128xf32>
    %2 = tpu.transpose %1, [1, 0] : vector<196x128xf32> -> vector<128x196xf32>
    %c0_2 = arith.constant 0 : index
    %c0_3 = arith.constant 0 : index
    %c0_4 = arith.constant 0 : index
    %3 = vector.load %arg4[%c0_2, %c0_3, %c0_4] : memref<1x128x196xf32, #tpu.memory_space<vmem>>, vector<1x128x196xf32>
    %4 = vector.shape_cast %3 : vector<1x128x196xf32> to vector<128x196xf32>
    %5 = vector.shape_cast %2 : vector<128x196xf32> to vector<1x128x196xf32>
    tpu.vector_store %arg4[%c0_2, %c0_3, %c0_4], %5 {strides = array<i32>} : memref<1x128x196xf32, #tpu.memory_space<vmem>>, vector<1x128x196xf32>,
    return
  }
  func.func @transform_0(%arg0: i32, %arg1: i32, %arg2: i32) -> (i32, i32, i32) {
    %c0_i32 = arith.constant 0 : i32
    return %arg0, %arg1, %arg2 : i32, i32, i32
  }
  func.func @transform_1(%arg0: i32, %arg1: i32, %arg2: i32) -> (i32, i32, i32) {
    %c0_i32 = arith.constant 0 : i32
    return %arg0, %arg2, %arg1 : i32, i32, i32
  }
}

</mosaic_0001>

<llo_original>
// kernel: tpu_custom_call.1
$region0: #{tpu_custom_call.1}
  #allocation0 [shape = 'u32[]', space=smem, size = 0x4, offset = 0x4, fixed_abs, tag = 'smem constant byte address 0x4 - core index']
  #allocation1 [shape = 'u32[144,128]{1,0:T(1,128)}', space=vmem, size = 0x12000, scoped, tag = 'internal scratch']
  %s0 = inlined_call_operand.vmem [shape: f32[2,196,384], index: 0, kind: input, shape index: {}]
  %s1 = inlined_call_operand.vmem [shape: f32[2,384,196], index: 1, kind: output, shape index: {}]
  %s2 = sld [smem:[#allocation0]]
  $region75: #{tpu_custom_call.1} parent=0
    _
  %s4 = ssub.s32 1, %s2
  %s5 = scalar_select 0, %s4, %s2
  $region1: #{tpu_custom_call.1} parent=0
    #allocation2 [shape = 'u8[204800]{0}', space=vmem, size = 0x32000, scoped, tag = 'input window, operand 0']
    loop: start=0, step=1, limit=8
    $region2: #{tpu_custom_call.1} parent=1 // loop_pre_header
      _
    $region3: #{tpu_custom_call.1} parent=1 // loop_header
      %s7 = sphi 0, %s11
      %p8 = scmp.ge.s32.totalorder %s7, 8
      %s14 = sphi 0, %s33
      %s15 = sphi 0, %s29
      %s16 = sphi 0, %s25
      %s17 = sphi 0, %s14
      %s18 = sphi 0, %s15
      %s19 = sphi 0, %s16
      %s20 = sphi 0, %s17
      %s21 = sphi 0, %s18
      %s22 = sphi 0, %s19
      %s40 = sphi 0, %s42
      %s43 = sphi 0, %s40
      %s44 = sphi 0, %s43
      %s60 = sphi 0, %s44
      %s70 = sphi 0, %s72
      %s73 = sphi 0, %s70
      %s74 = sphi 0, %s73
      %s90 = sphi 0, %s74
    $region4: #{tpu_custom_call.1} parent=1 // loop_header_branch
      %10 = sbr.rel (%p8) target = $region8
    $region5: #{tpu_custom_call.1} parent=1 // loop_body
      %s12 = ssub.s32 %s7, 1
      %s13 = ssub.s32 %s7, 2
      %s23 = sadd.s32 1, %s16
      %p24 = scmp.ge.s32.totalorder %s23, 3
      %s25 = scalar_select %p24, 0, %s23
      %s26 = sadd.s32 1, %s15
      %s27 = scalar_select %p24, %s26, %s15
      %p28 = scmp.ge.s32.totalorder %s27, 1
      %s29 = scalar_select %p28, 0, %s27
      %s30 = sadd.s32 1, %s14
      %s31 = scalar_select %p28, %s30, %s14
      %p32 = scmp.ge.s32.totalorder %s31, 2
      %s33 = scalar_select %p32, 0, %s31
      %s34 = ssub.s32 %s14, %s33
      %s35 = ssub.s32 %s15, %s29
      %s36 = sor.u32 %s34, %s35
      %s37 = ssub.s32 %s16, %s25
      %s38 = sor.u32 %s36, %s37
      %p39 = scmp.eq.s32.totalorder %s38, 0
      %s41 = sadd.s32 %s40, 1
      %s42 = scalar_select %p39, %s40, %s41
      %p45 = pneg %p39
      %p46 = scmp.eq.s32.totalorder %s7, 5
      %p47 = por %p45, %p46
      %p48 = scmp.ne.s32.totalorder %s40, %s43
      %p49 = scmp.eq.s32.totalorder %s7, 0
      %p50 = por %p48, %p49
      %p51 = scmp.ne.s32.totalorder %s40, %s43
      %p52 = scmp.eq.s32.totalorder %s12, 5
      %p53 = por %p51, %p52
      %p54 = scmp.ne.s32.totalorder %s43, %s44
      %p55 = scmp.eq.s32.totalorder %s12, 0
      %p56 = por %p54, %p55
      %p57 = scmp.ne.s32.totalorder %s43, %s44
      %p58 = scmp.eq.s32.totalorder %s13, 5
      %p59 = por %p57, %p58
      %p61 = scmp.ne.s32.totalorder %s44, %s60
      %p62 = scmp.eq.s32.totalorder %s13, 0
      %p63 = por %p61, %p62
      %s64 = ssub.s32 %s14, %s33
      %s65 = ssub.s32 %s16, %s25
      %s66 = sor.u32 %s64, %s65
      %s67 = ssub.s32 %s15, %s29
      %s68 = sor.u32 %s66, %s67
      %p69 = scmp.eq.s32.totalorder %s68, 0
      %s71 = sadd.s32 %s70, 1
      %s72 = scalar_select %p69, %s70, %s71
      %p75 = pneg %p69
      %p76 = scmp.eq.s32.totalorder %s7, 5
      %p77 = por %p75, %p76
      %p78 = scmp.ne.s32.totalorder %s70, %s73
      %p79 = scmp.eq.s32.totalorder %s7, 0
      %p80 = por %p78, %p79
      %p81 = scmp.ne.s32.totalorder %s70, %s73
      %p82 = scmp.eq.s32.totalorder %s12, 5
      %p83 = por %p81, %p82
      %p84 = scmp.ne.s32.totalorder %s73, %s74
      %p85 = scmp.eq.s32.totalorder %s12, 0
      %p86 = por %p84, %p85
      %p87 = scmp.ne.s32.totalorder %s73, %s74
      %p88 = scmp.eq.s32.totalorder %s13, 5
      %p89 = por %p87, %p88
      %p91 = scmp.ne.s32.totalorder %s74, %s90
      %p92 = scmp.eq.s32.totalorder %s13, 0
      %p93 = por %p91, %p92
      %p94 = scmp.le.s32.totalorder 1, %s7
      %p95 = scmp.lt.s32.totalorder %s7, 7
      %p96 = pnand %p94, %p95
      %p97 = pneg %p96
      // Predicated region
      $region9: #{tpu_custom_call.1} parent=5 // pred_check
        _
      $region10: #{tpu_custom_call.1} parent=5 // pred_check_branch
        %99 = sbr.rel (%p96) target = $region12
      $region11: #{tpu_custom_call.1} parent=5 // pred_region
        %s100 = ssub.s32 %s7, 1
      $region12: #{tpu_custom_call.1} parent=5 // pred_fallthru
        _
      %p101 = scmp.lt.s32.totalorder %s7, 6
      // Predicated region
      $region13: #{tpu_custom_call.1} parent=5 // pred_check
        %p102 = pneg %p101
      $region14: #{tpu_custom_call.1} parent=5 // pred_check_branch
        %104 = sbr.rel (%p102) target = $region16
      $region15: #{tpu_custom_call.1} parent=5 // pred_region
        // Predicated region
        $region17: #{tpu_custom_call.1} parent=15 // pred_check
          %p105 = pneg %p50
        $region18: #{tpu_custom_call.1} parent=15 // pred_check_branch
          %107 = sbr.rel (%p105) target = $region20
        $region19: #{tpu_custom_call.1} parent=15 // pred_region
          %s108 = sand.u32 %s40, 1
          %s109 = sand.u32 %s40, 1
          %s110 = smul.addr %s109, 200
          %s111 = scalar_lea.vmem [#allocation2], %s110
          %s112 = smul.u32 25, %s15
          %s113 = smul.addr %s112, 3
          %s114 = sadd.s32 %s16, %s113
          %s115 = smul.addr %s14, 75
          %s116 = sadd.s32 %s114, %s115
          %s117 = smul.addr %s116, 8
          %s118 = scalar_lea.vmem %s0, %s117
          // Predicated region
          $region21: #{tpu_custom_call.1} parent=19 // pred_check
            _
          $region22: #{tpu_custom_call.1} parent=19 // pred_check_branch
            %120 = sbr.rel (0) target = $region24
          $region23: #{tpu_custom_call.1} parent=19 // pred_region
            // Predicated region
            $region25: #{tpu_custom_call.1} parent=23 // pred_check
              _
            $region26: #{tpu_custom_call.1} parent=23 // pred_check_branch
              %122 = sbr.rel (0) target = $region28
            $region27: #{tpu_custom_call.1} parent=23 // pred_region
              // Predicated region
              $region40: #{tpu_custom_call.1} parent=27 // pred_check
                _
              $region41: #{tpu_custom_call.1} parent=27 // pred_check_branch
                %185 = sbr.rel (0) target = $region43
              $region42: #{tpu_custom_call.1} parent=27 // pred_region
                loop: start=0, step=1, limit=1
                $region44: #{tpu_custom_call.1} parent=42 // loop_pre_header
                  _
                $region45: #{tpu_custom_call.1} parent=42 // loop_header
                  %s187 = sphi 0, %s191
                  %p188 = scmp.ge.s32.totalorder %s187, 1
                  %s192 = sphi %s118, %s118
                  %s193 = sphi %s111, %s111
                $region46: #{tpu_custom_call.1} parent=42 // loop_header_branch
                  %190 = sbr.rel (%p188) target = $region50
                $region47: #{tpu_custom_call.1} parent=42 // loop_body
                  %v194 = vld [vmem:[%s192] sm:$0xff]
                  %195 = vst [vmem:[%s193] sm:$0xff] %v194
                  %v196 = vld [vmem:[%s192 + $0x18] sm:$0xff]
                  %197 = vst [vmem:[%s193 + $0x8] sm:$0xff] %v196
                  %v198 = vld [vmem:[%s192 + $0x30] sm:$0xff]
                  %199 = vst [vmem:[%s193 + $0x10] sm:$0xff] %v198
                  %v200 = vld [vmem:[%s192 + $0x48] sm:$0xff]
                  %201 = vst [vmem:[%s193 + $0x18] sm:$0xff] %v200
                  %v202 = vld [vmem:[%s192 + $0x60] sm:$0xff]
                  %203 = vst [vmem:[%s193 + $0x20] sm:$0xff] %v202
                  %v204 = vld [vmem:[%s192 + $0x78] sm:$0xff]
                  %205 = vst [vmem:[%s193 + $0x28] sm:$0xff] %v204
                  %v206 = vld [vmem:[%s192 + $0x90] sm:$0xff]
                  %207 = vst [vmem:[%s193 + $0x30] sm:$0xff] %v206
                  %v208 = vld [vmem:[%s192 + $0xa8] sm:$0xff]
                  %209 = vst [vmem:[%s193 + $0x38] sm:$0xff] %v208
                  %v210 = vld [vmem:[%s192 + $0xc0] sm:$0xff]
                  %211 = vst [vmem:[%s193 + $0x40] sm:$0xff] %v210
                  %v212 = vld [vmem:[%s192 + $0xd8] sm:$0xff]
                  %213 = vst [vmem:[%s193 + $0x48] sm:$0xff] %v212
                  %v214 = vld [vmem:[%s192 + $0xf0] sm:$0xff]
                  %215 = vst [vmem:[%s193 + $0x50] sm:$0xff] %v214
                  %v216 = vld [vmem:[%s192 + $0x108] sm:$0xff]
                  %217 = vst [vmem:[%s193 + $0x58] sm:$0xff] %v216
                  %v218 = vld [vmem:[%s192 + $0x120] sm:$0xff]
                  %219 = vst [vmem:[%s193 + $0x60] sm:$0xff] %v218
                  %v220 = vld [vmem:[%s192 + $0x138] sm:$0xff]
                  %221 = vst [vmem:[%s193 + $0x68] sm:$0xff] %v220
                  %v222 = vld [vmem:[%s192 + $0x150] sm:$0xff]
                  %223 = vst [vmem:[%s193 + $0x70] sm:$0xff] %v222
                  %v224 = vld [vmem:[%s192 + $0x168] sm:$0xff]
                  %225 = vst [vmem:[%s193 + $0x78] sm:$0xff] %v224
                  %v226 = vld [vmem:[%s192 + $0x180] sm:$0xff]
                  %227 = vst [vmem:[%s193 + $0x80] sm:$0xff] %v226
                  %v228 = vld [vmem:[%s192 + $0x198] sm:$0xff]
                  %229 = vst [vmem:[%s193 + $0x88] sm:$0xff] %v228
                  %v230 = vld [vmem:[%s192 + $0x1b0] sm:$0xff]
                  %231 = vst [vmem:[%s193 + $0x90] sm:$0xff] %v230
                  %v232 = vld [vmem:[%s192 + $0x1c8] sm:$0xff]
                  %233 = vst [vmem:[%s193 + $0x98] sm:$0xff] %v232
                  %v234 = vld [vmem:[%s192 + $0x1e0] sm:$0xff]
                  %235 = vst [vmem:[%s193 + $0xa0] sm:$0xff] %v234
                  %v236 = vld [vmem:[%s192 + $0x1f8] sm:$0xff]
                  %237 = vst [vmem:[%s193 + $0xa8] sm:$0xff] %v236
                  %v238 = vld [vmem:[%s192 + $0x210] sm:$0xff]
                  %239 = vst [vmem:[%s193 + $0xb0] sm:$0xff] %v238
                  %v240 = vld [vmem:[%s192 + $0x228] sm:$0xff]
                  %241 = vst [vmem:[%s193 + $0xb8] sm:$0xff] %v240
                  %v242 = vld [vmem:[%s192 + $0x240] sm:$0xff]
                  %243 = vst [vmem:[%s193 + $0xc0] sm:$0xff] %v242
                $region48: #{tpu_custom_call.1} parent=42 // loop_footer
                  %s191 = sadd.s32 1, %s187
                $region49: #{tpu_custom_call.1} parent=42 // loop_footer_branch
                  %186 = sbr.rel target = $region45
                $region50: #{tpu_custom_call.1} parent=42 // loop_exit
                  _
              $region43: #{tpu_custom_call.1} parent=27 // pred_fallthru
                _
              // Predicated region
              $region51: #{tpu_custom_call.1} parent=27 // pred_check
                _
              $region52: #{tpu_custom_call.1} parent=27 // pred_check_branch
                %245 = sbr.rel target = $region54
              $region53: #{tpu_custom_call.1} parent=27 // pred_region
                _
              $region54: #{tpu_custom_call.1} parent=27 // pred_fallthru
                _
            $region28: #{tpu_custom_call.1} parent=23 // pred_fallthru
              _
            // Predicated region
            $region29: #{tpu_custom_call.1} parent=23 // pred_check
              _
            $region30: #{tpu_custom_call.1} parent=23 // pred_check_branch
              %124 = sbr.rel target = $region32
            $region31: #{tpu_custom_call.1} parent=23 // pred_region
              loop: start=0, step=1, limit=1
              $region33: #{tpu_custom_call.1} parent=31 // loop_pre_header
                _
              $region34: #{tpu_custom_call.1} parent=31 // loop_header
                %s127 = sphi 0, %s131
                %p128 = scmp.ge.s32.totalorder %s127, 1
                %s132 = sphi %s118, %s118
                %s133 = sphi %s111, %s111
              $region35: #{tpu_custom_call.1} parent=31 // loop_header_branch
                %130 = sbr.rel (%p128) target = $region39
              $region36: #{tpu_custom_call.1} parent=31 // loop_body
                %v134 = vld [vmem:[%s132] sm:$0xff]
                %135 = vst [vmem:[%s133] sm:$0xff] %v134
                %v136 = vld [vmem:[%s132 + $0x18] sm:$0xff]
                %137 = vst [vmem:[%s133 + $0x8] sm:$0xff] %v136
                %v138 = vld [vmem:[%s132 + $0x30] sm:$0xff]
                %139 = vst [vmem:[%s133 + $0x10] sm:$0xff] %v138
                %v140 = vld [vmem:[%s132 + $0x48] sm:$0xff]
                %141 = vst [vmem:[%s133 + $0x18] sm:$0xff] %v140
                %v142 = vld [vmem:[%s132 + $0x60] sm:$0xff]
                %143 = vst [vmem:[%s133 + $0x20] sm:$0xff] %v142
                %v144 = vld [vmem:[%s132 + $0x78] sm:$0xff]
                %145 = vst [vmem:[%s133 + $0x28] sm:$0xff] %v144
                %v146 = vld [vmem:[%s132 + $0x90] sm:$0xff]
                %147 = vst [vmem:[%s133 + $0x30] sm:$0xff] %v146
                %v148 = vld [vmem:[%s132 + $0xa8] sm:$0xff]
                %149 = vst [vmem:[%s133 + $0x38] sm:$0xff] %v148
                %v150 = vld [vmem:[%s132 + $0xc0] sm:$0xff]
                %151 = vst [vmem:[%s133 + $0x40] sm:$0xff] %v150
                %v152 = vld [vmem:[%s132 + $0xd8] sm:$0xff]
                %153 = vst [vmem:[%s133 + $0x48] sm:$0xff] %v152
                %v154 = vld [vmem:[%s132 + $0xf0] sm:$0xff]
                %155 = vst [vmem:[%s133 + $0x50] sm:$0xff] %v154
                %v156 = vld [vmem:[%s132 + $0x108] sm:$0xff]
                %157 = vst [vmem:[%s133 + $0x58] sm:$0xff] %v156
                %v158 = vld [vmem:[%s132 + $0x120] sm:$0xff]
                %159 = vst [vmem:[%s133 + $0x60] sm:$0xff] %v158
                %v160 = vld [vmem:[%s132 + $0x138] sm:$0xff]
                %161 = vst [vmem:[%s133 + $0x68] sm:$0xff] %v160
                %v162 = vld [vmem:[%s132 + $0x150] sm:$0xff]
                %163 = vst [vmem:[%s133 + $0x70] sm:$0xff] %v162
                %v164 = vld [vmem:[%s132 + $0x168] sm:$0xff]
                %165 = vst [vmem:[%s133 + $0x78] sm:$0xff] %v164
                %v166 = vld [vmem:[%s132 + $0x180] sm:$0xff]
                %167 = vst [vmem:[%s133 + $0x80] sm:$0xff] %v166
                %v168 = vld [vmem:[%s132 + $0x198] sm:$0xff]
                %169 = vst [vmem:[%s133 + $0x88] sm:$0xff] %v168
                %v170 = vld [vmem:[%s132 + $0x1b0] sm:$0xff]
                %171 = vst [vmem:[%s133 + $0x90] sm:$0xff] %v170
                %v172 = vld [vmem:[%s132 + $0x1c8] sm:$0xff]
                %173 = vst [vmem:[%s133 + $0x98] sm:$0xff] %v172
                %v174 = vld [vmem:[%s132 + $0x1e0] sm:$0xff]
                %175 = vst [vmem:[%s133 + $0xa0] sm:$0xff] %v174
                %v176 = vld [vmem:[%s132 + $0x1f8] sm:$0xff]
                %177 = vst [vmem:[%s133 + $0xa8] sm:$0xff] %v176
                %v178 = vld [vmem:[%s132 + $0x210] sm:$0xff]
                %179 = vst [vmem:[%s133 + $0xb0] sm:$0xff] %v178
                %v180 = vld [vmem:[%s132 + $0x228] sm:$0xff]
                %181 = vst [vmem:[%s133 + $0xb8] sm:$0xff] %v180
                %v182 = vld [vmem:[%s132 + $0x240] sm:$0xff]
                %183 = vst [vmem:[%s133 + $0xc0] sm:$0xff] %v182
              $region37: #{tpu_custom_call.1} parent=31 // loop_footer
                %s131 = sadd.s32 1, %s127
              $region38: #{tpu_custom_call.1} parent=31 // loop_footer_branch
                %126 = sbr.rel target = $region34
              $region39: #{tpu_custom_call.1} parent=31 // loop_exit
                _
            $region32: #{tpu_custom_call.1} parent=23 // pred_fallthru
              _
          $region24: #{tpu_custom_call.1} parent=19 // pred_fallthru
            _
          %246 = vnop
        $region20: #{tpu_custom_call.1} parent=15 // pred_fallthru
          _
      $region16: #{tpu_custom_call.1} parent=5 // pred_fallthru
        _
      %p247 = scmp.le.s32.totalorder 1, %s7
      %p248 = scmp.lt.s32.totalorder %s7, 7
      %p249 = pnand %p247, %p248
      %p250 = pneg %p249
      // Predicated region
      $region55: #{tpu_custom_call.1} parent=5 // pred_check
        _
      $region56: #{tpu_custom_call.1} parent=5 // pred_check_branch
        %252 = sbr.rel (%p249) target = $region58
      $region57: #{tpu_custom_call.1} parent=5 // pred_region
        %s253 = ssub.s32 %s7, 1
        %s254 = sand.u32 %s43, 1
        %s255 = sand.u32 %s43, 1
        %s256 = smul.addr %s255, 200
        %s257 = scalar_lea.vmem [#allocation2], %s256
        // Predicated region
        $region59: #{tpu_custom_call.1} parent=57 // pred_check
          %p258 = pneg %p56
        $region60: #{tpu_custom_call.1} parent=57 // pred_check_branch
          %260 = sbr.rel (%p258) target = $region62
        $region61: #{tpu_custom_call.1} parent=57 // pred_region
          _
        $region62: #{tpu_custom_call.1} parent=57 // pred_fallthru
          _
        %s261 = sand.u32 %s43, 1
        %s262 = sand.u32 %s43, 1
        %s263 = smul.addr %s262, 200
        %s264 = scalar_lea.vmem [#allocation2], %s263
        %p265 = pneg %p56
        %p266 = pneg %p53
        %p267 = pneg %p86
        %p268 = pneg %p83
        %s269 = smul.u32 16, %s19
        %s270 = smul.u32 2, %s18
        %p271 = scmp.lt.s32.totalorder %s17, 1
        %s272 = scalar_select %p271, %s17, 1
        %p273 = scmp.lt.s32.totalorder %s269, 47
        %s274 = scalar_select %p273, %s269, 47
        %p275 = scmp.lt.s32.totalorder %s270, 1
        %s276 = scalar_select %p275, %s270, 1
        %s277 = smul.addr %s274, 2
        %s278 = sadd.s32 %s276, %s277
        %s279 = smul.addr %s272, 96
        %s280 = sadd.s32 %s278, %s279
        %s281 = smul.addr %s280, 8
        %s282 = scalar_lea.vmem %s1, %s281
        %s283 = smul.u32 25, %s18
        %s284 = smul.u32 16, %s19
        %s285 = smul.u32 2, %s18
        %p286 = scmp.lt.s32.totalorder %s17, 1
        %s287 = scalar_select %p286, %s17, 1
        %p288 = scmp.lt.s32.totalorder %s284, 47
        %s289 = scalar_select %p288, %s284, 47
        %p290 = scmp.lt.s32.totalorder %s285, 1
        %s291 = scalar_select %p290, %s285, 1
        %s292 = smul.addr %s289, 2
        %s293 = sadd.s32 %s291, %s292
        %s294 = smul.addr %s287, 96
        %s295 = sadd.s32 %s293, %s294
        %s296 = smul.addr %s295, 8
        %s297 = scalar_lea.vmem %s1, %s296
        %s298 = smul.u32 16, %s19
        %s299 = smul.u32 2, %s18
        %v300 = vld [vmem:[%s257] sm:$0xff]
        %v301 = vld [vmem:[%s257 + $0x8] sm:$0xff]
        %v302 = vld [vmem:[%s257 + $0x10] sm:$0xff]
        %v303 = vld [vmem:[%s257 + $0x18] sm:$0xff]
        %v304 = vld [vmem:[%s257 + $0x20] sm:$0xff]
        %v305 = vld [vmem:[%s257 + $0x28] sm:$0xff]
        %v306 = vld [vmem:[%s257 + $0x30] sm:$0xff]
        %v307 = vld [vmem:[%s257 + $0x38] sm:$0xff]
        %v308 = vld [vmem:[%s257 + $0x40] sm:$0xff]
        %v309 = vld [vmem:[%s257 + $0x48] sm:$0xff]
        %v310 = vld [vmem:[%s257 + $0x50] sm:$0xff]
        %v311 = vld [vmem:[%s257 + $0x58] sm:$0xff]
        %v312 = vld [vmem:[%s257 + $0x60] sm:$0xff]
        %v313 = vld [vmem:[%s257 + $0x68] sm:$0xff]
        %v314 = vld [vmem:[%s257 + $0x70] sm:$0xff]
        %v315 = vld [vmem:[%s257 + $0x78] sm:$0xff]
        %v316 = vld [vmem:[%s257 + $0x80] sm:$0xff]
        %v317 = vld [vmem:[%s257 + $0x88] sm:$0xff]
        %v318 = vld [vmem:[%s257 + $0x90] sm:$0xff]
        %v319 = vld [vmem:[%s257 + $0x98] sm:$0xff]
        %v320 = vld [vmem:[%s257 + $0xa0] sm:$0xff]
        %v321 = vld [vmem:[%s257 + $0xa8] sm:$0xff]
        %v322 = vld [vmem:[%s257 + $0xb0] sm:$0xff]
        %v323 = vld [vmem:[%s257 + $0xb8] sm:$0xff]
        %v324 = vld [vmem:[%s257 + $0xc0] sm:$0xf]
        %325 = vxpose.xlu0.b32.start [1/16] %v300, 128
        %326 = vxpose.xlu0.b32.cont [2/16] %v301, 128
        %327 = vxpose.xlu0.b32.cont [3/16] %v302, 128
        %328 = vxpose.xlu0.b32.cont [4/16] %v303, 128
        %329 = vxpose.xlu0.b32.cont [5/16] %v304, 128
        %330 = vxpose.xlu0.b32.cont [6/16] %v305, 128
        %331 = vxpose.xlu0.b32.cont [7/16] %v306, 128
        %332 = vxpose.xlu0.b32.cont [8/16] %v307, 128
        %333 = vxpose.xlu0.b32.cont [9/16] %v308, 128
        %334 = vxpose.xlu0.b32.cont [10/16] %v309, 128
        %335 = vxpose.xlu0.b32.cont [11/16] %v310, 128
        %336 = vxpose.xlu0.b32.cont [12/16] %v311, 128
        %337 = vxpose.xlu0.b32.cont [13/16] %v312, 128
        %338 = vxpose.xlu0.b32.cont [14/16] %v313, 128
        %339 = vxpose.xlu0.b32.cont [15/16] %v314, 128
        %340 = vxpose.xlu0.b32.end [16/16] %v315, 128
        %v341 = vpop.trf.xlu0
        %v342 = vpop.trf.xlu0
        %v343 = vpop.trf.xlu0
        %v344 = vpop.trf.xlu0
        %v345 = vpop.trf.xlu0
        %v346 = vpop.trf.xlu0
        %v347 = vpop.trf.xlu0
        %v348 = vpop.trf.xlu0
        %v349 = vpop.trf.xlu0
        %v350 = vpop.trf.xlu0
        %v351 = vpop.trf.xlu0
        %v352 = vpop.trf.xlu0
        %v353 = vpop.trf.xlu0
        %v354 = vpop.trf.xlu0
        %v355 = vpop.trf.xlu0
        %v356 = vpop.trf.xlu0
        %357 = vxpose.xlu0.b32.start [1/16] %v316, 128
        %358 = vxpose.xlu0.b32.cont [2/16] %v317, 128
        %359 = vxpose.xlu0.b32.cont [3/16] %v318, 128
        %360 = vxpose.xlu0.b32.cont [4/16] %v319, 128
        %361 = vxpose.xlu0.b32.cont [5/16] %v320, 128
        %362 = vxpose.xlu0.b32.cont [6/16] %v321, 128
        %363 = vxpose.xlu0.b32.cont [7/16] %v322, 128
        %364 = vxpose.xlu0.b32.cont [8/16] %v323, 128
        %365 = vxpose.xlu0.b32.cont [9/16] %v324, 128
        %366 = vxpose.xlu0.b32.cont [10/16] 0.0, 128
        %367 = vxpose.xlu0.b32.cont [11/16] 0.0, 128
        %368 = vxpose.xlu0.b32.cont [12/16] 0.0, 128
        %369 = vxpose.xlu0.b32.cont [13/16] 0.0, 128
        %370 = vxpose.xlu0.b32.cont [14/16] 0.0, 128
        %371 = vxpose.xlu0.b32.cont [15/16] 0.0, 128
        %372 = vxpose.xlu0.b32.end [16/16] 0.0, 128
        %v373 = vpop.trf.xlu0
        %v374 = vpop.trf.xlu0
        %v375 = vpop.trf.xlu0
        %v376 = vpop.trf.xlu0
        %v377 = vpop.trf.xlu0
        %v378 = vpop.trf.xlu0
        %v379 = vpop.trf.xlu0
        %v380 = vpop.trf.xlu0
        %v381 = vpop.trf.xlu0
        %v382 = vpop.trf.xlu0
        %v383 = vpop.trf.xlu0
        %v384 = vpop.trf.xlu0
        %v385 = vpop.trf.xlu0
        %v386 = vpop.trf.xlu0
        %v387 = vpop.trf.xlu0
        %v388 = vpop.trf.xlu0
        %389 = vst [vmem:[%s297] sm:$0xff] %v341
        %vm390 = vcmask 556032
        %391 = vst.msk [vmem:[%s297 + $0x8] sm:$0xff] %vm390, %v373
        %392 = vst [vmem:[%s297 + $0x10] sm:$0xff] %v342
        %393 = vst.msk [vmem:[%s297 + $0x18] sm:$0xff] %vm390, %v374
        %394 = vst [vmem:[%s297 + $0x20] sm:$0xff] %v343
        %395 = vst.msk [vmem:[%s297 + $0x28] sm:$0xff] %vm390, %v375
        %396 = vst [vmem:[%s297 + $0x30] sm:$0xff] %v344
        %397 = vst.msk [vmem:[%s297 + $0x38] sm:$0xff] %vm390, %v376
        %398 = vst [vmem:[%s297 + $0x40] sm:$0xff] %v345
        %399 = vst.msk [vmem:[%s297 + $0x48] sm:$0xff] %vm390, %v377
        %400 = vst [vmem:[%s297 + $0x50] sm:$0xff] %v346
        %401 = vst.msk [vmem:[%s297 + $0x58] sm:$0xff] %vm390, %v378
        %402 = vst [vmem:[%s297 + $0x60] sm:$0xff] %v347
        %403 = vst.msk [vmem:[%s297 + $0x68] sm:$0xff] %vm390, %v379
        %404 = vst [vmem:[%s297 + $0x70] sm:$0xff] %v348
        %405 = vst.msk [vmem:[%s297 + $0x78] sm:$0xff] %vm390, %v380
        %406 = vst [vmem:[%s297 + $0x80] sm:$0xff] %v349
        %407 = vst.msk [vmem:[%s297 + $0x88] sm:$0xff] %vm390, %v381
        %408 = vst [vmem:[%s297 + $0x90] sm:$0xff] %v350
        %409 = vst.msk [vmem:[%s297 + $0x98] sm:$0xff] %vm390, %v382
        %410 = vst [vmem:[%s297 + $0xa0] sm:$0xff] %v351
        %411 = vst.msk [vmem:[%s297 + $0xa8] sm:$0xff] %vm390, %v383
        %412 = vst [vmem:[%s297 + $0xb0] sm:$0xff] %v352
        %413 = vst.msk [vmem:[%s297 + $0xb8] sm:$0xff] %vm390, %v384
        %414 = vst [vmem:[%s297 + $0xc0] sm:$0xff] %v353
        %415 = vst.msk [vmem:[%s297 + $0xc8] sm:$0xff] %vm390, %v385
        %416 = vst [vmem:[%s297 + $0xd0] sm:$0xff] %v354
        %417 = vst.msk [vmem:[%s297 + $0xd8] sm:$0xff] %vm390, %v386
        %418 = vst [vmem:[%s297 + $0xe0] sm:$0xff] %v355
        %419 = vst.msk [vmem:[%s297 + $0xe8] sm:$0xff] %vm390, %v387
        %420 = vst [vmem:[%s297 + $0xf0] sm:$0xff] %v356
        %421 = vst.msk [vmem:[%s297 + $0xf8] sm:$0xff] %vm390, %v388
        %s422 = smul.u32 16, %s19
        %s423 = smul.u32 2, %s18
        %p424 = scmp.lt.s32.totalorder %s17, 1
        %s425 = scalar_select %p424, %s17, 1
        %p426 = scmp.lt.s32.totalorder %s422, 47
        %s427 = scalar_select %p426, %s422, 47
        %p428 = scmp.lt.s32.totalorder %s423, 1
        %s429 = scalar_select %p428, %s423, 1
        %s430 = smul.addr %s427, 2
        %s431 = sadd.s32 %s429, %s430
        %s432 = smul.addr %s425, 96
        %s433 = sadd.s32 %s431, %s432
        %s434 = smul.addr %s433, 8
        %s435 = scalar_lea.vmem %s1, %s434
        // Predicated region
        $region63: #{tpu_custom_call.1} parent=57 // pred_check
          %p436 = pneg %p83
        $region64: #{tpu_custom_call.1} parent=57 // pred_check_branch
          %438 = sbr.rel (%p436) target = $region66
        $region65: #{tpu_custom_call.1} parent=57 // pred_region
          %s439 = smul.u32 16, %s19
          %s440 = smul.u32 2, %s18
        $region66: #{tpu_custom_call.1} parent=57 // pred_fallthru
          _
      $region58: #{tpu_custom_call.1} parent=5 // pred_fallthru
        _
      %p441 = scmp.le.s32.totalorder 2, %s7
      // Predicated region
      $region67: #{tpu_custom_call.1} parent=5 // pred_check
        %p442 = pneg %p441
      $region68: #{tpu_custom_call.1} parent=5 // pred_check_branch
        %444 = sbr.rel (%p442) target = $region70
      $region69: #{tpu_custom_call.1} parent=5 // pred_region
        %s445 = ssub.s32 %s7, 2
        // Predicated region
        $region71: #{tpu_custom_call.1} parent=69 // pred_check
          %p446 = pneg %p89
        $region72: #{tpu_custom_call.1} parent=69 // pred_check_branch
          %448 = sbr.rel (%p446) target = $region74
        $region73: #{tpu_custom_call.1} parent=69 // pred_region
          %s449 = smul.u32 16, %s22
          %s450 = smul.u32 2, %s21
          %p451 = scmp.lt.s32.totalorder %s20, 1
          %s452 = scalar_select %p451, %s20, 1
          %p453 = scmp.lt.s32.totalorder %s449, 47
          %s454 = scalar_select %p453, %s449, 47
          %p455 = scmp.lt.s32.totalorder %s450, 1
          %s456 = scalar_select %p455, %s450, 1
          %s457 = smul.addr %s454, 2
          %s458 = sadd.s32 %s456, %s457
          %s459 = smul.addr %s452, 96
          %s460 = sadd.s32 %s458, %s459
          %s461 = smul.addr %s460, 8
          %s462 = scalar_lea.vmem %s1, %s461
        $region74: #{tpu_custom_call.1} parent=69 // pred_fallthru
          _
      $region70: #{tpu_custom_call.1} parent=5 // pred_fallthru
        _
    $region6: #{tpu_custom_call.1} parent=1 // loop_footer
      %s11 = sadd.s32 1, %s7
    $region7: #{tpu_custom_call.1} parent=1 // loop_footer_branch
      %6 = sbr.rel target = $region3
    $region8: #{tpu_custom_call.1} parent=1 // loop_exit
      _

</llo_original>
